<compile_context>
chip_gen: v5e
topology: v5e:2x2
jax: 0.10.0
libtpu: 0.0.40
codegen_flags: <defaults>
</compile_context>

<pallas_src>
import functools

import jax
import jax.numpy as jnp
from jax import lax
from jax.experimental import pallas as pl
from jax.experimental.pallas import tpu as pltpu

BN_EPS = 1e-5   # PyTorch BatchNorm default eps
LANE = 128
SUB = 8


def _round_up(n, m):
    return ((n + m - 1) // m) * m


def _vmem_2d_bytes(r, c, itemsize=4):
    """Bytes one (r, c) f32 block occupies in VMEM after (8, 128) padding."""
    return _round_up(max(r, 1), SUB) * _round_up(max(c, 1), LANE) * itemsize


def _classifier_kernel(x_ref,                       # (bt, C, ts) slab of bt images
                       s0_ref, sh0_ref,             # bn0 folded scale/shift   (1, C)
                       w1_ref,                      # fc1 weight (in, out)     (C, H1)
                       s1_ref, sh1_ref,             # bn1 scale / shift(+fc1 bias)  (1, H1)
                       wo_ref, bo_ref,              # out weight/bias, padded  (H1, CP), (1, CP)
                       out_ref,                     # (bt, CP) lane-dense
                       acc_ref,                     # running max scratch      (bt, C)
                       *, rem, mask_tail):
    """Grid = (batch blocks, spatial tiles); spatial (reduction) axis is last."""
    k = pl.program_id(1)
    nk = pl.num_programs(1)

    # ---- init running max for this batch block ----
    @pl.when(k == 0)
    def _():
        acc_ref[...] = jnp.full(acc_ref.shape, -jnp.inf, acc_ref.dtype)

    # ---- AdaptiveMaxPool2d(1): running max over the spatial axis ----
    def _update(valid_cols=None):
        xt = x_ref[...].astype(jnp.float32)                         # (bt, C, ts)
        if valid_cols is not None:
            col = lax.broadcasted_iota(jnp.int32, xt.shape, 2)
            xt = jnp.where(col < valid_cols, xt, -jnp.inf)
        acc_ref[...] = jnp.maximum(acc_ref[...], jnp.max(xt, axis=-1))   # (bt, C)

    if mask_tail:
        # Only the final partial tile needs the -inf mask; full tiles stay cheap.
        @pl.when(k == nk - 1)
        def _():
            _update(rem)

        @pl.when(k < nk - 1)
        def _():
            _update()
    else:
        _update()

    # ---- BN/ReLU/MLP tail: once per batch block, on the last spatial step ----
    @pl.when(k == nk - 1)
    def _():
        pooled = acc_ref[...]                                                # (bt, C)
        h = jnp.maximum(pooled * s0_ref[...] + sh0_ref[...], 0.0)            # (bt, C)
        h = jnp.dot(h, w1_ref[...], preferred_element_type=jnp.float32)      # (bt, H1)
        h = jnp.maximum(h * s1_ref[...] + sh1_ref[...], 0.0)                 # (bt, H1)
        out_ref[...] = (jnp.dot(h, wo_ref[...], preferred_element_type=jnp.float32)
                        + bo_ref[...])                                       # (bt, CP)


def _pick_tiling(B, C, S, x_budget_bytes, tile_s, bt_max):
    """Choose (bt images per step, spatial tile ts, number of spatial tiles)."""
    Cp = _round_up(C, SUB)

    def xbuf_bytes(bt, ts):               # double-buffered x slab, VMEM-padded
        return 2 * bt * Cp * _round_up(ts, LANE) * 4

    if S <= tile_s and xbuf_bytes(1, S) <= x_budget_bytes:
        # Single spatial step per image.  Batch as many images per step as (a) divides
        # B exactly, (b) fits the x budget, and (c) leaves >= 2 batch blocks so the
        # "parallel" axis can still feed both v7x TensorCores.
        bt = 1
        for d in range(2, min(B, bt_max) + 1):
            if B % d == 0 and B // d >= 2 and xbuf_bytes(d, S) <= x_budget_bytes:
                bt = d
        return bt, S, 1

    # Spatial tiling (each per-image tile is already a large DMA): bt = 1.
    ts_cap = max(LANE, (x_budget_bytes // (2 * Cp * 4)) // LANE * LANE)
    ts = max(LANE, min((tile_s // LANE) * LANE, ts_cap))
    return 1, ts, pl.cdiv(S, ts)


def classifier_forward(x_nchw, params, *, tile_s=1024, bt_max=8,
                       vmem_budget_bytes=12 * 1024 * 1024):
    """x_nchw: (B, C, H, W) float32.  Returns (B, classes) float32 (eval-mode BN)."""
    B, C, H, W = x_nchw.shape
    S = H * W
    x = x_nchw.reshape(B, C, S)

    H1 = params["w1"].shape[1]
    classes = params["wo"].shape[1]
    CP = _round_up(classes, LANE)                 # lane-dense padded class width

    # ---- fold BatchNorms (eval mode) into scale/shift ROW vectors ----
    s0 = params["g0"] * lax.rsqrt(params["v0"] + BN_EPS)                  # (1, C)
    sh0 = params["b0"] - params["m0"] * s0                                # (1, C)
    s1 = params["g1"] * lax.rsqrt(params["v1"] + BN_EPS)                  # (1, H1)
    sh1 = params["b1"] * s1 + (params["be1"] - params["m1"] * s1)         # fc1 bias folded in
    w1 = params["w1"]                                                     # (C, H1)
    wo_pad = jnp.zeros((H1, CP), jnp.float32).at[:, :classes].set(params["wo"])
    bo_pad = jnp.zeros((1, CP), jnp.float32).at[:, :classes].set(params["bo"])

    # ---- VMEM budget left for the double-buffered x slab ----
    fixed = 2 * (2 * _vmem_2d_bytes(1, C) + _vmem_2d_bytes(C, H1)
                 + 2 * _vmem_2d_bytes(1, H1) + _vmem_2d_bytes(H1, CP)
                 + _vmem_2d_bytes(1, CP))
    fixed += 2 * _vmem_2d_bytes(bt_max, CP) + _vmem_2d_bytes(bt_max, C)
    x_budget = max(vmem_budget_bytes - fixed, 2 * _round_up(C, SUB) * LANE * 4)

    bt, ts, grid_s = _pick_tiling(B, C, S, x_budget, tile_s, bt_max)
    nb = B // bt
    rem = S - (grid_s - 1) * ts                    # valid columns in the last tile
    mask_tail = (S % ts) != 0

    kernel = functools.partial(_classifier_kernel, rem=rem, mask_tail=mask_tail)

    def const(shape):  # small parameter block, resident across the whole grid
        return pl.BlockSpec(shape, lambda b, k: (0,) * len(shape))

    param_bytes = 4 * (2 * C + C * H1 + 2 * H1 + H1 * CP + CP)
    cost = pl.CostEstimate(
        flops=2 * B * (C * H1 + H1 * classes),
        transcendentals=0,
        bytes_accessed=int(B * C * S * x.dtype.itemsize + param_bytes + B * CP * 4),
    )

    out = pl.pallas_call(
        kernel,
        out_shape=jax.ShapeDtypeStruct((nb, bt, CP), jnp.float32),
        grid_spec=pltpu.PrefetchScalarGridSpec(
            num_scalar_prefetch=0,
            grid=(nb, grid_s),
            in_specs=[
                pl.BlockSpec((bt, C, ts), lambda b, k: (b, 0, k)),   # x slab (pipelined)
                const((1, C)), const((1, C)),                        # bn0 scale / shift
                const((C, H1)),                                      # fc1 weight
                const((1, H1)), const((1, H1)),                      # bn1 scale / shift(+bias)
                const((H1, CP)), const((1, CP)),                     # out weight / bias (padded)
            ],
            out_specs=pl.BlockSpec((None, bt, CP), lambda b, k: (b, 0, 0)),
            scratch_shapes=[pltpu.VMEM((bt, C), jnp.float32)],       # running max
        ),
        compiler_params=pltpu.CompilerParams(
            dimension_semantics=("parallel", "arbitrary")),
        cost_estimate=cost,
    )(x, s0, sh0, w1, s1, sh1, wo_pad, bo_pad)

    return out.reshape(B, CP)[:, :classes]                           # (B, classes)


def init_params(key, in_features, hidden, classes):
    """Deterministic synthetic parameters (shapes follow the nn.Module __init__)."""
    ks = jax.random.split(key, 13)
    f32 = jnp.float32
    p = {}
    # bn0 over in_features
    p["g0"] = jax.random.uniform(ks[0], (1, in_features), f32, 0.5, 1.5)
    p["b0"] = jax.random.normal(ks[1], (1, in_features), f32) * 0.1
    p["m0"] = jax.random.normal(ks[2], (1, in_features), f32) * 0.1
    p["v0"] = jax.random.uniform(ks[3], (1, in_features), f32, 0.5, 1.5)
    # fc1: Linear(in_features, hidden) -- stored transposed (in, out)
    p["w1"] = jax.random.normal(ks[4], (in_features, hidden), f32) / jnp.sqrt(in_features)
    p["b1"] = jax.random.normal(ks[5], (1, hidden), f32) * 0.1
    # bn1 over hidden
    p["g1"] = jax.random.uniform(ks[6], (1, hidden), f32, 0.5, 1.5)
    p["be1"] = jax.random.normal(ks[7], (1, hidden), f32) * 0.1
    p["m1"] = jax.random.normal(ks[8], (1, hidden), f32) * 0.1
    p["v1"] = jax.random.uniform(ks[9], (1, hidden), f32, 0.5, 1.5)
    # out: Linear(hidden, classes) -- stored transposed (in, out)
    p["wo"] = jax.random.normal(ks[10], (hidden, classes), f32) / jnp.sqrt(hidden)
    p["bo"] = jax.random.normal(ks[11], (1, classes), f32) * 0.1
    return p


def reference_forward(x_nchw, p):
    """Pure-JAX reference of the same forward (eval-mode BN, unfolded)."""
    B, C, H, W = x_nchw.shape
    pooled = jnp.max(x_nchw.reshape(B, C, H * W), axis=-1)
    s0 = p["g0"] / jnp.sqrt(p["v0"] + BN_EPS)
    h = jnp.maximum((pooled - p["m0"]) * s0 + p["b0"], 0.0)
    h = h @ p["w1"] + p["b1"]
    s1 = p["g1"] / jnp.sqrt(p["v1"] + BN_EPS)
    h = jnp.maximum((h - p["m1"]) * s1 + p["be1"], 0.0)
    return h @ p["wo"] + p["bo"]


def _check(out, ref, name):
    assert out.shape == ref.shape, f"{name}: shape {out.shape} vs {ref.shape}"
    assert jnp.allclose(out, ref, atol=1e-3, rtol=1e-3), f"{name}: mismatch vs reference"


if __name__ == "__main__":
    hidden, classes = 32, 10
    key = jax.random.PRNGKey(0)
    k1, k2, k3, kp1, kp2, kp3 = jax.random.split(key, 6)

    # 1) Primary small case (single spatial step, whole image per grid step).
    B, C, H, W = 2, 4, 16, 16
    x = jax.random.normal(k1, (B, C, H, W), jnp.float32)
    params = init_params(kp1, C, hidden, classes)
    out = jax.block_until_ready(classifier_forward(x, params))
    _check(out, reference_forward(x, params), "single-step")

    # 2) Spatial-tiled case with a partial (masked) last tile: S=300, ts=128.
    B, C, H, W = 3, 8, 15, 20
    x = jax.random.normal(k2, (B, C, H, W), jnp.float32)
    params = init_params(kp2, C, hidden, classes)
    out = jax.block_until_ready(classifier_forward(x, params, tile_s=128))
    _check(out, reference_forward(x, params), "tiled+masked")

    # 3) Batch-blocked case (bt=2 images per grid step, fused tail matmul on bt rows).
    B, C, H, W = 4, 8, 5, 5
    x = jax.random.normal(k3, (B, C, H, W), jnp.float32)
    params = init_params(kp3, C, hidden, classes)
    out = jax.block_until_ready(classifier_forward(x, params))
    _check(out, reference_forward(x, params), "batch-blocked")

    print("KERNEL_OK")
</pallas_src>

<mosaic_0001>
module attributes {stable_mosaic.version = 11 : i64} {
  func.func @_classifier_kernel(%arg0: i32, %arg1: i32, %arg2: memref<1x4x256xf32, #tpu.memory_space<vmem>>, %arg3: memref<1x4xf32, #tpu.memory_space<vmem>>, %arg4: memref<1x4xf32, #tpu.memory_space<vmem>>, %arg5: memref<4x32xf32, #tpu.memory_space<vmem>>, %arg6: memref<1x32xf32, #tpu.memory_space<vmem>>, %arg7: memref<1x32xf32, #tpu.memory_space<vmem>>, %arg8: memref<32x128xf32, #tpu.memory_space<vmem>>, %arg9: memref<1x128xf32, #tpu.memory_space<vmem>>, %arg10: memref<1x1x128xf32, #tpu.memory_space<vmem>>, %arg11: memref<1x4xf32, #tpu.memory_space<vmem>>) attributes {dimension_semantics = [#tpu.dimension_semantics<parallel>, #tpu.dimension_semantics<arbitrary>], iteration_bounds = array<i64: 2, 1>, scalar_prefetch = 0 : i64, scratch_operands = 1 : i64, tpu.core_type = #tpu.core_type<tc>, window_params = [{transform_indices = @transform_0, window_bounds = array<i64: 1, 4, 256>}, {pipeline_mode = #tpu.pipeline_mode<synchronous>, transform_indices = @transform_1, window_bounds = array<i64: 1, 4>}, {pipeline_mode = #tpu.pipeline_mode<synchronous>, transform_indices = @transform_2, window_bounds = array<i64: 1, 4>}, {pipeline_mode = #tpu.pipeline_mode<synchronous>, transform_indices = @transform_3, window_bounds = array<i64: 4, 32>}, {pipeline_mode = #tpu.pipeline_mode<synchronous>, transform_indices = @transform_4, window_bounds = array<i64: 1, 32>}, {pipeline_mode = #tpu.pipeline_mode<synchronous>, transform_indices = @transform_5, window_bounds = array<i64: 1, 32>}, {pipeline_mode = #tpu.pipeline_mode<synchronous>, transform_indices = @transform_6, window_bounds = array<i64: 32, 128>}, {pipeline_mode = #tpu.pipeline_mode<synchronous>, transform_indices = @transform_7, window_bounds = array<i64: 1, 128>}, {transform_indices = @transform_8, window_bounds = array<i64: 1, 1, 128>}]} {
    %c0_i32 = arith.constant 0 : i32
    %0 = arith.cmpi eq, %arg1, %c0_i32 : i32
    %1 = arith.extui %0 : i1 to i32
    %c0_i32_0 = arith.constant 0 : i32
    %2 = arith.cmpi ne, %1, %c0_i32_0 : i32
    scf.if %2 {
      %cst_9 = arith.constant 0xFF800000 : f32
      %11 = vector.broadcast %cst_9 : f32 to vector<1x4xf32>
      %c0_10 = arith.constant 0 : index
      %c0_11 = arith.constant 0 : index
      %12 = vector.load %arg11[%c0_10, %c0_11] : memref<1x4xf32, #tpu.memory_space<vmem>>, vector<1x4xf32>
      tpu.vector_store %arg11[%c0_10, %c0_11], %11 {strides = array<i32>} : memref<1x4xf32, #tpu.memory_space<vmem>>, vector<1x4xf32>,
    } else {
    }
    %c0 = arith.constant 0 : index
    %c0_1 = arith.constant 0 : index
    %c0_2 = arith.constant 0 : index
    %3 = vector.load %arg2[%c0, %c0_1, %c0_2] : memref<1x4x256xf32, #tpu.memory_space<vmem>>, vector<1x4x256xf32>
    %c0_3 = arith.constant 0 : index
    %c0_4 = arith.constant 0 : index
    %4 = vector.load %arg11[%c0_3, %c0_4] : memref<1x4xf32, #tpu.memory_space<vmem>>, vector<1x4xf32>
    %cst = arith.constant dense<0xFF800000> : vector<1x4xf32>
    %5 = vector.multi_reduction <maximumf>, %3, %cst [2] : vector<1x4x256xf32> to vector<1x4xf32>
    %6 = arith.maximumf %4, %5 : vector<1x4xf32>
    %c0_5 = arith.constant 0 : index
    %c0_6 = arith.constant 0 : index
    %7 = vector.load %arg11[%c0_5, %c0_6] : memref<1x4xf32, #tpu.memory_space<vmem>>, vector<1x4xf32>
    tpu.vector_store %arg11[%c0_5, %c0_6], %6 {strides = array<i32>} : memref<1x4xf32, #tpu.memory_space<vmem>>, vector<1x4xf32>,
    %c0_i32_7 = arith.constant 0 : i32
    %8 = arith.cmpi eq, %arg1, %c0_i32_7 : i32
    %9 = arith.extui %8 : i1 to i32
    %c0_i32_8 = arith.constant 0 : i32
    %10 = arith.cmpi ne, %9, %c0_i32_8 : i32
    scf.if %10 {
      %c0_9 = arith.constant 0 : index
      %c0_10 = arith.constant 0 : index
      %11 = vector.load %arg11[%c0_9, %c0_10] : memref<1x4xf32, #tpu.memory_space<vmem>>, vector<1x4xf32>
      %c0_11 = arith.constant 0 : index
      %c0_12 = arith.constant 0 : index
      %12 = vector.load %arg3[%c0_11, %c0_12] : memref<1x4xf32, #tpu.memory_space<vmem>>, vector<1x4xf32>
      %13 = arith.mulf %11, %12 : vector<1x4xf32>
      %c0_13 = arith.constant 0 : index
      %c0_14 = arith.constant 0 : index
      %14 = vector.load %arg4[%c0_13, %c0_14] : memref<1x4xf32, #tpu.memory_space<vmem>>, vector<1x4xf32>
      %15 = arith.addf %13, %14 : vector<1x4xf32>
      %cst_15 = arith.constant 0.000000e+00 : f32
      %16 = vector.broadcast %cst_15 : f32 to vector<1x4xf32>
      %17 = arith.maximumf %15, %16 : vector<1x4xf32>
      %c0_16 = arith.constant 0 : index
      %c0_17 = arith.constant 0 : index
      %18 = vector.load %arg5[%c0_16, %c0_17] : memref<4x32xf32, #tpu.memory_space<vmem>>, vector<4x32xf32>
      %cst_18 = arith.constant dense<0.000000e+00> : vector<1x32xf32>
      %19 = tpu.matmul %17, %18, %cst_18 {dimension_numbers = #tpu.dot_dimension_numbers<[1], [0], [0], [1], [0, 0, 1, 1], [], []>} : vector<1x4xf32>, vector<4x32xf32>, vector<1x32xf32> -> vector<1x32xf32>
      %c0_19 = arith.constant 0 : index
      %c0_20 = arith.constant 0 : index
      %20 = vector.load %arg6[%c0_19, %c0_20] : memref<1x32xf32, #tpu.memory_space<vmem>>, vector<1x32xf32>
      %21 = arith.mulf %19, %20 : vector<1x32xf32>
      %c0_21 = arith.constant 0 : index
      %c0_22 = arith.constant 0 : index
      %22 = vector.load %arg7[%c0_21, %c0_22] : memref<1x32xf32, #tpu.memory_space<vmem>>, vector<1x32xf32>
      %23 = arith.addf %21, %22 : vector<1x32xf32>
      %cst_23 = arith.constant 0.000000e+00 : f32
      %24 = vector.broadcast %cst_23 : f32 to vector<1x32xf32>
      %25 = arith.maximumf %23, %24 : vector<1x32xf32>
      %c0_24 = arith.constant 0 : index
      %c0_25 = arith.constant 0 : index
      %26 = vector.load %arg8[%c0_24, %c0_25] : memref<32x128xf32, #tpu.memory_space<vmem>>, vector<32x128xf32>
      %cst_26 = arith.constant dense<0.000000e+00> : vector<1x128xf32>
      %27 = tpu.matmul %25, %26, %cst_26 {dimension_numbers = #tpu.dot_dimension_numbers<[1], [0], [0], [1], [0, 0, 1, 1], [], []>} : vector<1x32xf32>, vector<32x128xf32>, vector<1x128xf32> -> vector<1x128xf32>
      %c0_27 = arith.constant 0 : index
      %c0_28 = arith.constant 0 : index
      %28 = vector.load %arg9[%c0_27, %c0_28] : memref<1x128xf32, #tpu.memory_space<vmem>>, vector<1x128xf32>
      %29 = arith.addf %27, %28 : vector<1x128xf32>
      %c0_29 = arith.constant 0 : index
      %c0_30 = arith.constant 0 : index
      %c0_31 = arith.constant 0 : index
      %30 = vector.load %arg10[%c0_29, %c0_30, %c0_31] : memref<1x1x128xf32, #tpu.memory_space<vmem>>, vector<1x1x128xf32>
      %31 = vector.shape_cast %30 : vector<1x1x128xf32> to vector<1x128xf32>
      %32 = vector.shape_cast %29 : vector<1x128xf32> to vector<1x1x128xf32>
      tpu.vector_store %arg10[%c0_29, %c0_30, %c0_31], %32 {strides = array<i32>} : memref<1x1x128xf32, #tpu.memory_space<vmem>>, vector<1x1x128xf32>,
    } else {
    }
    return
  }
  func.func @transform_0(%arg0: i32, %arg1: i32) -> (i32, i32, i32) {
    %c0_i32 = arith.constant 0 : i32
    %c0_i32_0 = arith.constant 0 : i32
    return %arg0, %c0_i32, %arg1 : i32, i32, i32
  }
  func.func @transform_1(%arg0: i32, %arg1: i32) -> (i32, i32) {
    %c0_i32 = arith.constant 0 : i32
    %c0_i32_0 = arith.constant 0 : i32
    %c0_i32_1 = arith.constant 0 : i32
    return %c0_i32, %c0_i32_0 : i32, i32
  }
  func.func @transform_2(%arg0: i32, %arg1: i32) -> (i32, i32) {
    %c0_i32 = arith.constant 0 : i32
    %c0_i32_0 = arith.constant 0 : i32
    %c0_i32_1 = arith.constant 0 : i32
    return %c0_i32, %c0_i32_0 : i32, i32
  }
  func.func @transform_3(%arg0: i32, %arg1: i32) -> (i32, i32) {
    %c0_i32 = arith.constant 0 : i32
    %c0_i32_0 = arith.constant 0 : i32
    %c0_i32_1 = arith.constant 0 : i32
    return %c0_i32, %c0_i32_0 : i32, i32
  }
  func.func @transform_4(%arg0: i32, %arg1: i32) -> (i32, i32) {
    %c0_i32 = arith.constant 0 : i32
    %c0_i32_0 = arith.constant 0 : i32
    %c0_i32_1 = arith.constant 0 : i32
    return %c0_i32, %c0_i32_0 : i32, i32
  }
  func.func @transform_5(%arg0: i32, %arg1: i32) -> (i32, i32) {
    %c0_i32 = arith.constant 0 : i32
    %c0_i32_0 = arith.constant 0 : i32
    %c0_i32_1 = arith.constant 0 : i32
    return %c0_i32, %c0_i32_0 : i32, i32
  }
  func.func @transform_6(%arg0: i32, %arg1: i32) -> (i32, i32) {
    %c0_i32 = arith.constant 0 : i32
    %c0_i32_0 = arith.constant 0 : i32
    %c0_i32_1 = arith.constant 0 : i32
    return %c0_i32, %c0_i32_0 : i32, i32
  }
  func.func @transform_7(%arg0: i32, %arg1: i32) -> (i32, i32) {
    %c0_i32 = arith.constant 0 : i32
    %c0_i32_0 = arith.constant 0 : i32
    %c0_i32_1 = arith.constant 0 : i32
    return %c0_i32, %c0_i32_0 : i32, i32
  }
  func.func @transform_8(%arg0: i32, %arg1: i32) -> (i32, i32, i32) {
    %c0_i32 = arith.constant 0 : i32
    %c0_i32_0 = arith.constant 0 : i32
    %c0_i32_1 = arith.constant 0 : i32
    return %arg0, %c0_i32, %c0_i32_0 : i32, i32, i32
  }
}

</mosaic_0001>

<llo_original>
// kernel: tpu_custom_call.1
$region0: #{tpu_custom_call.1}
  #allocation0 [shape = 'u32[]', space=smem, size = 0x4, offset = 0x4, fixed_abs, tag = 'smem constant byte address 0x4 - core index']
  #allocation1 [shape = 'u32[72,128]{1,0:T(1,128)}', space=vmem, size = 0x9000, scoped, tag = 'internal scratch']
  #allocation2 [shape = 'f32[1,4]{1,0:T(1,128)}', space=vmem, size = 0x200, scoped, tag = 'scratch operand']
  %s0 = inlined_call_operand.hbm [shape: f32[2,4,256], index: 0, kind: input, shape index: {}]
  %s1 = inlined_call_operand.hbm [shape: f32[1,4], index: 1, kind: input, shape index: {}]
  %s2 = inlined_call_operand.vmem [shape: f32[1,4], index: 2, kind: input, shape index: {}]
  %s3 = inlined_call_operand.hbm [shape: f32[4,32], index: 3, kind: input, shape index: {}]
  %s4 = inlined_call_operand.vmem [shape: f32[1,32], index: 4, kind: input, shape index: {}]
  %s5 = inlined_call_operand.vmem [shape: f32[1,32], index: 5, kind: input, shape index: {}]
  %s6 = inlined_call_operand.hbm [shape: f32[32,128], index: 6, kind: input, shape index: {}]
  %s7 = inlined_call_operand.vmem [shape: f32[1,128], index: 7, kind: input, shape index: {}]
  %s8 = inlined_call_operand.hbm [shape: f32[2,1,128], index: 8, kind: output, shape index: {}]
  %s9 = sld [smem:[#allocation0]]
  $region89: #{tpu_custom_call.1} parent=0
    _
  %s11 = ssub.s32 1, %s9
  %s12 = scalar_select 0, %s11, %s9
  $region1: #{tpu_custom_call.1} parent=0
    #allocation3 [shape = 'u8[8192]{0}', space=vmem, size = 0x2000, scoped, tag = 'input window, operand 0']
    #allocation4 [shape = 's32[2]{0}', space=sflag, size = 0x8, scoped, tag = 'scoped memory for tpu_custom_call.1']
    #allocation5 [shape = 's32[2]{0}', space=sflag, size = 0x8, scoped, tag = 'scoped memory for tpu_custom_call.1']
    #allocation6 [shape = 'u8[512]{0}', space=vmem, size = 0x400, scoped, tag = 'input window, operand 1, single buffered']
    #allocation7 [shape = 's32[1]{0}', space=sflag, size = 0x4, scoped, tag = 'scoped memory for tpu_custom_call.1']
    #allocation8 [shape = 'u8[2048]{0}', space=vmem, size = 0x800, scoped, tag = 'input window, operand 3, single buffered']
    #allocation9 [shape = 'u8[16384]{0}', space=vmem, size = 0x4000, scoped, tag = 'input window, operand 6, single buffered']
    #allocation10 [shape = 's32[1]{0}', space=sflag, size = 0x4, scoped, tag = 'scoped memory for tpu_custom_call.1']
    #allocation11 [shape = 'u8[1024]{0}', space=vmem, size = 0x400, scoped, tag = 'output window, operand 0']
    %13 = vsyncpa [#allocation4], 0
    %s14 = scalar_lea.sflag [#allocation4], 1
    %15 = vsyncpa %s14, 0
    %16 = vsyncpa [#allocation7], 0
    %17 = vsyncpa [#allocation10], 0
    %18 = vsyncpa [#allocation5], 0
    %s19 = scalar_lea.sflag [#allocation5], 1
    %20 = vsyncpa %s19, 0
    loop: start=0, step=1, limit=4
    $region2: #{tpu_custom_call.1} parent=1 // loop_pre_header
      _
    $region3: #{tpu_custom_call.1} parent=1 // loop_header
      %s22 = sphi 0, %s26
      %p23 = scmp.ge.s32.totalorder %s22, 4
      %s29 = sphi 0, %s41
      %s30 = sphi 0, %s37
      %s31 = sphi 0, %s29
      %s32 = sphi 0, %s30
      %s33 = sphi 0, %s31
      %s34 = sphi 0, %s32
      %s46 = sphi 0, %s48
      %s49 = sphi 0, %s46
      %s50 = sphi 0, %s49
      %s66 = sphi 0, %s50
      %s70 = sphi 0, %s70
      %s72 = sphi 0, %s70
      %s73 = sphi 0, %s72
      %s87 = sphi 0, %s73
      %s91 = sphi 0, %s91
      %s93 = sphi 0, %s91
      %s94 = sphi 0, %s93
      %s108 = sphi 0, %s94
      %s112 = sphi 0, %s112
      %s114 = sphi 0, %s112
      %s115 = sphi 0, %s114
      %s129 = sphi 0, %s115
      %s133 = sphi 0, %s133
      %s135 = sphi 0, %s133
      %s136 = sphi 0, %s135
      %s150 = sphi 0, %s136
      %s154 = sphi 0, %s154
      %s156 = sphi 0, %s154
      %s157 = sphi 0, %s156
      %s171 = sphi 0, %s157
      %s175 = sphi 0, %s175
      %s177 = sphi 0, %s175
      %s178 = sphi 0, %s177
      %s192 = sphi 0, %s178
      %s196 = sphi 0, %s196
      %s198 = sphi 0, %s196
      %s199 = sphi 0, %s198
      %s213 = sphi 0, %s199
      %s219 = sphi 0, %s221
      %s222 = sphi 0, %s219
      %s223 = sphi 0, %s222
      %s239 = sphi 0, %s223
    $region4: #{tpu_custom_call.1} parent=1 // loop_header_branch
      %25 = sbr.rel (%p23) target = $region8
    $region5: #{tpu_custom_call.1} parent=1 // loop_body
      %s27 = ssub.s32 %s22, 1
      %s28 = ssub.s32 %s22, 2
      %s35 = sadd.s32 1, %s30
      %p36 = scmp.ge.s32.totalorder %s35, 1
      %s37 = scalar_select %p36, 0, %s35
      %s38 = sadd.s32 1, %s29
      %s39 = scalar_select %p36, %s38, %s29
      %p40 = scmp.ge.s32.totalorder %s39, 2
      %s41 = scalar_select %p40, 0, %s39
      %s42 = ssub.s32 %s29, %s41
      %s43 = ssub.s32 %s30, %s37
      %s44 = sor.u32 %s42, %s43
      %p45 = scmp.eq.s32.totalorder %s44, 0
      %s47 = sadd.s32 %s46, 1
      %s48 = scalar_select %p45, %s46, %s47
      %p51 = pneg %p45
      %p52 = scmp.eq.s32.totalorder %s22, 1
      %p53 = por %p51, %p52
      %p54 = scmp.ne.s32.totalorder %s46, %s49
      %p55 = scmp.eq.s32.totalorder %s22, 0
      %p56 = por %p54, %p55
      %p57 = scmp.ne.s32.totalorder %s46, %s49
      %p58 = scmp.eq.s32.totalorder %s27, 1
      %p59 = por %p57, %p58
      %p60 = scmp.ne.s32.totalorder %s49, %s50
      %p61 = scmp.eq.s32.totalorder %s27, 0
      %p62 = por %p60, %p61
      %p63 = scmp.ne.s32.totalorder %s49, %s50
      %p64 = scmp.eq.s32.totalorder %s28, 1
      %p65 = por %p63, %p64
      %p67 = scmp.ne.s32.totalorder %s50, %s66
      %p68 = scmp.eq.s32.totalorder %s28, 0
      %p69 = por %p67, %p68
      %s71 = sadd.s32 %s70, 1
      %p74 = scmp.eq.s32.totalorder %s22, 1
      %p75 = scmp.ne.s32.totalorder %s70, %s72
      %p76 = scmp.eq.s32.totalorder %s22, 0
      %p77 = por %p75, %p76
      %p78 = scmp.ne.s32.totalorder %s70, %s72
      %p79 = scmp.eq.s32.totalorder %s27, 1
      %p80 = por %p78, %p79
      %p81 = scmp.ne.s32.totalorder %s72, %s73
      %p82 = scmp.eq.s32.totalorder %s27, 0
      %p83 = por %p81, %p82
      %p84 = scmp.ne.s32.totalorder %s72, %s73
      %p85 = scmp.eq.s32.totalorder %s28, 1
      %p86 = por %p84, %p85
      %p88 = scmp.ne.s32.totalorder %s73, %s87
      %p89 = scmp.eq.s32.totalorder %s28, 0
      %p90 = por %p88, %p89
      %s92 = sadd.s32 %s91, 1
      %p95 = scmp.eq.s32.totalorder %s22, 1
      %p96 = scmp.ne.s32.totalorder %s91, %s93
      %p97 = scmp.eq.s32.totalorder %s22, 0
      %p98 = por %p96, %p97
      %p99 = scmp.ne.s32.totalorder %s91, %s93
      %p100 = scmp.eq.s32.totalorder %s27, 1
      %p101 = por %p99, %p100
      %p102 = scmp.ne.s32.totalorder %s93, %s94
      %p103 = scmp.eq.s32.totalorder %s27, 0
      %p104 = por %p102, %p103
      %p105 = scmp.ne.s32.totalorder %s93, %s94
      %p106 = scmp.eq.s32.totalorder %s28, 1
      %p107 = por %p105, %p106
      %p109 = scmp.ne.s32.totalorder %s94, %s108
      %p110 = scmp.eq.s32.totalorder %s28, 0
      %p111 = por %p109, %p110
      %s113 = sadd.s32 %s112, 1
      %p116 = scmp.eq.s32.totalorder %s22, 1
      %p117 = scmp.ne.s32.totalorder %s112, %s114
      %p118 = scmp.eq.s32.totalorder %s22, 0
      %p119 = por %p117, %p118
      %p120 = scmp.ne.s32.totalorder %s112, %s114
      %p121 = scmp.eq.s32.totalorder %s27, 1
      %p122 = por %p120, %p121
      %p123 = scmp.ne.s32.totalorder %s114, %s115
      %p124 = scmp.eq.s32.totalorder %s27, 0
      %p125 = por %p123, %p124
      %p126 = scmp.ne.s32.totalorder %s114, %s115
      %p127 = scmp.eq.s32.totalorder %s28, 1
      %p128 = por %p126, %p127
      %p130 = scmp.ne.s32.totalorder %s115, %s129
      %p131 = scmp.eq.s32.totalorder %s28, 0
      %p132 = por %p130, %p131
      %s134 = sadd.s32 %s133, 1
      %p137 = scmp.eq.s32.totalorder %s22, 1
      %p138 = scmp.ne.s32.totalorder %s133, %s135
      %p139 = scmp.eq.s32.totalorder %s22, 0
      %p140 = por %p138, %p139
      %p141 = scmp.ne.s32.totalorder %s133, %s135
      %p142 = scmp.eq.s32.totalorder %s27, 1
      %p143 = por %p141, %p142
      %p144 = scmp.ne.s32.totalorder %s135, %s136
      %p145 = scmp.eq.s32.totalorder %s27, 0
      %p146 = por %p144, %p145
      %p147 = scmp.ne.s32.totalorder %s135, %s136
      %p148 = scmp.eq.s32.totalorder %s28, 1
      %p149 = por %p147, %p148
      %p151 = scmp.ne.s32.totalorder %s136, %s150
      %p152 = scmp.eq.s32.totalorder %s28, 0
      %p153 = por %p151, %p152
      %s155 = sadd.s32 %s154, 1
      %p158 = scmp.eq.s32.totalorder %s22, 1
      %p159 = scmp.ne.s32.totalorder %s154, %s156
      %p160 = scmp.eq.s32.totalorder %s22, 0
      %p161 = por %p159, %p160
      %p162 = scmp.ne.s32.totalorder %s154, %s156
      %p163 = scmp.eq.s32.totalorder %s27, 1
      %p164 = por %p162, %p163
      %p165 = scmp.ne.s32.totalorder %s156, %s157
      %p166 = scmp.eq.s32.totalorder %s27, 0
      %p167 = por %p165, %p166
      %p168 = scmp.ne.s32.totalorder %s156, %s157
      %p169 = scmp.eq.s32.totalorder %s28, 1
      %p170 = por %p168, %p169
      %p172 = scmp.ne.s32.totalorder %s157, %s171
      %p173 = scmp.eq.s32.totalorder %s28, 0
      %p174 = por %p172, %p173
      %s176 = sadd.s32 %s175, 1
      %p179 = scmp.eq.s32.totalorder %s22, 1
      %p180 = scmp.ne.s32.totalorder %s175, %s177
      %p181 = scmp.eq.s32.totalorder %s22, 0
      %p182 = por %p180, %p181
      %p183 = scmp.ne.s32.totalorder %s175, %s177
      %p184 = scmp.eq.s32.totalorder %s27, 1
      %p185 = por %p183, %p184
      %p186 = scmp.ne.s32.totalorder %s177, %s178
      %p187 = scmp.eq.s32.totalorder %s27, 0
      %p188 = por %p186, %p187
      %p189 = scmp.ne.s32.totalorder %s177, %s178
      %p190 = scmp.eq.s32.totalorder %s28, 1
      %p191 = por %p189, %p190
      %p193 = scmp.ne.s32.totalorder %s178, %s192
      %p194 = scmp.eq.s32.totalorder %s28, 0
      %p195 = por %p193, %p194
      %s197 = sadd.s32 %s196, 1
      %p200 = scmp.eq.s32.totalorder %s22, 1
      %p201 = scmp.ne.s32.totalorder %s196, %s198
      %p202 = scmp.eq.s32.totalorder %s22, 0
      %p203 = por %p201, %p202
      %p204 = scmp.ne.s32.totalorder %s196, %s198
      %p205 = scmp.eq.s32.totalorder %s27, 1
      %p206 = por %p204, %p205
      %p207 = scmp.ne.s32.totalorder %s198, %s199
      %p208 = scmp.eq.s32.totalorder %s27, 0
      %p209 = por %p207, %p208
      %p210 = scmp.ne.s32.totalorder %s198, %s199
      %p211 = scmp.eq.s32.totalorder %s28, 1
      %p212 = por %p210, %p211
      %p214 = scmp.ne.s32.totalorder %s199, %s213
      %p215 = scmp.eq.s32.totalorder %s28, 0
      %p216 = por %p214, %p215
      %s217 = ssub.s32 %s29, %s41
      %p218 = scmp.eq.s32.totalorder %s217, 0
      %s220 = sadd.s32 %s219, 1
      %s221 = scalar_select %p218, %s219, %s220
      %p224 = pneg %p218
      %p225 = scmp.eq.s32.totalorder %s22, 1
      %p226 = por %p224, %p225
      %p227 = scmp.ne.s32.totalorder %s219, %s222
      %p228 = scmp.eq.s32.totalorder %s22, 0
      %p229 = por %p227, %p228
      %p230 = scmp.ne.s32.totalorder %s219, %s222
      %p231 = scmp.eq.s32.totalorder %s27, 1
      %p232 = por %p230, %p231
      %p233 = scmp.ne.s32.totalorder %s222, %s223
      %p234 = scmp.eq.s32.totalorder %s27, 0
      %p235 = por %p233, %p234
      %p236 = scmp.ne.s32.totalorder %s222, %s223
      %p237 = scmp.eq.s32.totalorder %s28, 1
      %p238 = por %p236, %p237
      %p240 = scmp.ne.s32.totalorder %s223, %s239
      %p241 = scmp.eq.s32.totalorder %s28, 0
      %p242 = por %p240, %p241
      %p243 = scmp.le.s32.totalorder 1, %s22
      %p244 = scmp.lt.s32.totalorder %s22, 3
      %p245 = pnand %p243, %p244
      %p246 = pneg %p245
      // Predicated region
      $region9: #{tpu_custom_call.1} parent=5 // pred_check
        _
      $region10: #{tpu_custom_call.1} parent=5 // pred_check_branch
        %248 = sbr.rel (%p245) target = $region12
      $region11: #{tpu_custom_call.1} parent=5 // pred_region
        %s249 = ssub.s32 %s22, 1
        // Predicated region
        $region13: #{tpu_custom_call.1} parent=11 // pred_check
          %p250 = pneg %p83
        $region14: #{tpu_custom_call.1} parent=11 // pred_check_branch
          %252 = sbr.rel (%p250) target = $region16
        $region15: #{tpu_custom_call.1} parent=11 // pred_region
          %254 = vsyncadd [#allocation7], 0
          %s256 = sshll.u32 %s1, 4
          %s257 = int_to_ptr.hbm [resolvable:$true] %s256
          %s258 = sshll.u32 [#allocation6], 4
          %s259 = int_to_ptr.vmem [resolvable:$true] %s258
          %261 = dma.hbm_to_vmem [thread:$0]  %s257, 16, %s259, [#allocation7]
        $region16: #{tpu_custom_call.1} parent=11 // pred_fallthru
          _
        // Predicated region
        $region17: #{tpu_custom_call.1} parent=11 // pred_check
          %p262 = pneg %p104
        $region18: #{tpu_custom_call.1} parent=11 // pred_check_branch
          %264 = sbr.rel (%p262) target = $region20
        $region19: #{tpu_custom_call.1} parent=11 // pred_region
          _
        $region20: #{tpu_custom_call.1} parent=11 // pred_fallthru
          _
        // Predicated region
        $region21: #{tpu_custom_call.1} parent=11 // pred_check
          %p265 = pneg %p125
        $region22: #{tpu_custom_call.1} parent=11 // pred_check_branch
          %267 = sbr.rel (%p265) target = $region24
        $region23: #{tpu_custom_call.1} parent=11 // pred_region
          %269 = vsyncadd [#allocation7], 0
          %s271 = sshll.u32 %s3, 4
          %s272 = int_to_ptr.hbm [resolvable:$true] %s271
          %s273 = sshll.u32 [#allocation8], 4
          %s274 = int_to_ptr.vmem [resolvable:$true] %s273
          %276 = dma.hbm_to_vmem [thread:$0]  %s272, 64, %s274, [#allocation7]
        $region24: #{tpu_custom_call.1} parent=11 // pred_fallthru
          _
        // Predicated region
        $region25: #{tpu_custom_call.1} parent=11 // pred_check
          %p277 = pneg %p146
        $region26: #{tpu_custom_call.1} parent=11 // pred_check_branch
          %279 = sbr.rel (%p277) target = $region28
        $region27: #{tpu_custom_call.1} parent=11 // pred_region
          _
        $region28: #{tpu_custom_call.1} parent=11 // pred_fallthru
          _
        // Predicated region
        $region29: #{tpu_custom_call.1} parent=11 // pred_check
          %p280 = pneg %p167
        $region30: #{tpu_custom_call.1} parent=11 // pred_check_branch
          %282 = sbr.rel (%p280) target = $region32
        $region31: #{tpu_custom_call.1} parent=11 // pred_region
          _
        $region32: #{tpu_custom_call.1} parent=11 // pred_fallthru
          _
        // Predicated region
        $region33: #{tpu_custom_call.1} parent=11 // pred_check
          %p283 = pneg %p188
        $region34: #{tpu_custom_call.1} parent=11 // pred_check_branch
          %285 = sbr.rel (%p283) target = $region36
        $region35: #{tpu_custom_call.1} parent=11 // pred_region
          %287 = vsyncadd [#allocation10], 0
          %s288 = sshll.u32 %s6, 4
          %s289 = int_to_ptr.hbm [resolvable:$true] %s288
          %s290 = sshll.u32 [#allocation9], 4
          %s291 = int_to_ptr.vmem [resolvable:$true] %s290
          %296 = dma.hbm_to_vmem [thread:$0]  %s289, 512, %s291, [#allocation10], 128, 128, 8
        $region36: #{tpu_custom_call.1} parent=11 // pred_fallthru
          _
        // Predicated region
        $region37: #{tpu_custom_call.1} parent=11 // pred_check
          %p297 = pneg %p209
        $region38: #{tpu_custom_call.1} parent=11 // pred_check_branch
          %299 = sbr.rel (%p297) target = $region40
        $region39: #{tpu_custom_call.1} parent=11 // pred_region
          _
        $region40: #{tpu_custom_call.1} parent=11 // pred_fallthru
          _
      $region12: #{tpu_custom_call.1} parent=5 // pred_fallthru
        _
      %p300 = scmp.lt.s32.totalorder %s22, 2
      // Predicated region
      $region41: #{tpu_custom_call.1} parent=5 // pred_check
        %p301 = pneg %p300
      $region42: #{tpu_custom_call.1} parent=5 // pred_check_branch
        %303 = sbr.rel (%p301) target = $region44
      $region43: #{tpu_custom_call.1} parent=5 // pred_region
        // Predicated region
        $region45: #{tpu_custom_call.1} parent=43 // pred_check
          %p304 = pneg %p56
        $region46: #{tpu_custom_call.1} parent=43 // pred_check_branch
          %306 = sbr.rel (%p304) target = $region48
        $region47: #{tpu_custom_call.1} parent=43 // pred_region
          %s307 = sand.u32 %s46, 1
          %s308 = scalar_lea.sflag [#allocation4], %s307
          %s309 = sand.u32 %s46, 1
          %s310 = smul.addr %s309, 8
          %s311 = scalar_lea.vmem [#allocation3], %s310
          %s312 = smul.u32 2, %s30
          %314 = vsyncadd %s308, 0
          %s315 = smul.addr %s29, 2
          %s316 = sadd.s32 %s312, %s315
          %s317 = smul.addr %s316, 4
          %s318 = scalar_lea.hbm %s0, %s317
          %s320 = sshll.u32 %s318, 4
          %s321 = int_to_ptr.hbm [resolvable:$true] %s320
          %s322 = sshll.u32 %s311, 4
          %s323 = int_to_ptr.vmem [resolvable:$true] %s322
          %325 = dma.hbm_to_vmem [thread:$0]  %s321, 128, %s323, %s308
        $region48: #{tpu_custom_call.1} parent=43 // pred_fallthru
          _
      $region44: #{tpu_custom_call.1} parent=5 // pred_fallthru
        _
      %p326 = scmp.le.s32.totalorder 1, %s22
      %p327 = scmp.lt.s32.totalorder %s22, 3
      %p328 = pnand %p326, %p327
      %p329 = pneg %p328
      // Predicated region
      $region49: #{tpu_custom_call.1} parent=5 // pred_check
        _
      $region50: #{tpu_custom_call.1} parent=5 // pred_check_branch
        %331 = sbr.rel (%p328) target = $region52
      $region51: #{tpu_custom_call.1} parent=5 // pred_region
        %s332 = ssub.s32 %s22, 1
        %s333 = sand.u32 %s49, 1
        %s334 = scalar_lea.sflag [#allocation4], %s333
        %s335 = sand.u32 %s49, 1
        %s336 = smul.addr %s335, 8
        %s337 = scalar_lea.vmem [#allocation3], %s336
        // Predicated region
        $region53: #{tpu_custom_call.1} parent=51 // pred_check
          %p338 = pneg %p62
        $region54: #{tpu_custom_call.1} parent=51 // pred_check_branch
          %340 = sbr.rel (%p338) target = $region56
        $region55: #{tpu_custom_call.1} parent=51 // pred_region
          %342 = dma.done %s334, 128
        $region56: #{tpu_custom_call.1} parent=51 // pred_fallthru
          _
        // Predicated region
        $region57: #{tpu_custom_call.1} parent=51 // pred_check
          %p343 = pneg %p83
        $region58: #{tpu_custom_call.1} parent=51 // pred_check_branch
          %345 = sbr.rel (%p343) target = $region60
        $region59: #{tpu_custom_call.1} parent=51 // pred_region
          %347 = dma.done [#allocation7], 16
        $region60: #{tpu_custom_call.1} parent=51 // pred_fallthru
          _
        // Predicated region
        $region61: #{tpu_custom_call.1} parent=51 // pred_check
          %p348 = pneg %p125
        $region62: #{tpu_custom_call.1} parent=51 // pred_check_branch
          %350 = sbr.rel (%p348) target = $region64
        $region63: #{tpu_custom_call.1} parent=51 // pred_region
          %352 = dma.done [#allocation7], 64
        $region64: #{tpu_custom_call.1} parent=51 // pred_fallthru
          _
        // Predicated region
        $region65: #{tpu_custom_call.1} parent=51 // pred_check
          %p353 = pneg %p188
        $region66: #{tpu_custom_call.1} parent=51 // pred_check_branch
          %355 = sbr.rel (%p353) target = $region68
        $region67: #{tpu_custom_call.1} parent=51 // pred_region
          %357 = dma.done [#allocation10], 512
        $region68: #{tpu_custom_call.1} parent=51 // pred_fallthru
          _
        %s358 = sand.u32 %s49, 1
        %s359 = scalar_lea.sflag [#allocation4], %s358
        %s360 = sand.u32 %s49, 1
        %s361 = smul.addr %s360, 8
        %s362 = scalar_lea.vmem [#allocation3], %s361
        %p363 = pneg %p62
        %p364 = pneg %p59
        %p365 = pneg %p83
        %p366 = pneg %p80
        %p367 = pneg %p104
        %p368 = pneg %p101
        %p369 = pneg %p125
        %p370 = pneg %p122
        %p371 = pneg %p146
        %p372 = pneg %p143
        %p373 = pneg %p167
        %p374 = pneg %p164
        %p375 = pneg %p188
        %p376 = pneg %p185
        %p377 = pneg %p209
        %p378 = pneg %p206
        %p379 = pneg %p235
        %p380 = pneg %p232
        %s381 = sand.u32 %s222, 1
        %s382 = scalar_lea.sflag [#allocation5], %s381
        %s383 = sand.u32 %s222, 1
        %s384 = scalar_lea.vmem [#allocation11], %s383
        %s385 = smul.u32 2, %s32
        %p386 = scmp.eq.s32.totalorder %s32, 0
        // Predicated region
        $region69: #{tpu_custom_call.1} parent=51 // pred_check
          %p387 = pneg %p386
        $region70: #{tpu_custom_call.1} parent=51 // pred_check_branch
          %389 = sbr.rel (%p387) target = $region72
        $region71: #{tpu_custom_call.1} parent=51 // pred_region
          %vm390 = vcmask 24576
          %391 = vst.msk [vmem:[#allocation2] sm:$0x1] %vm390, -inf
        $region72: #{tpu_custom_call.1} parent=51 // pred_fallthru
          _
        %v392 = vld [vmem:[%s337] sm:$0xff]
        %v393 = vld [vmem:[#allocation2] sm:$0x1]
        %395 = vst [vmem:[#allocation1] ss:$2 sm:$0xff] %v392
        %v396 = vld.sshfl [vmem:[#allocation1] sm:$0xff pattern:$0x75316420]
        %v397 = vld.sshfl [vmem:[#allocation1 + $0x8] sm:$0xff pattern:$0x75316420]
        %vm400 = vcmask 1043456
        %v401 = vsel %vm400, %v396, -inf
        %v402 = vsel %vm400, %v397, -inf
        %v403 = vmax.f32 %v401, %v402
        %404 = vmax.xlane.f32.xlu0 %v403
        %v405 = vpop.xlane.xlu0 %404
        %v407 = vperm.slane %v405, 0
        %v408 = vperm.slane %v405, 1
        %v409 = vperm.slane %v405, 2
        %v410 = vperm.slane %v405, 3
        %411 = vst [vmem:[#allocation1] ss:$9 sm:$0xff] %v407
        %s412 = scalar_lea.vmem [#allocation1], 1
        %413 = vst [vmem:[%s412] ss:$9 sm:$0xff] %v408
        %s414 = scalar_lea.vmem [#allocation1], 2
        %415 = vst [vmem:[%s414] ss:$9 sm:$0xff] %v409
        %s416 = scalar_lea.vmem [#allocation1], 3
        %417 = vst [vmem:[%s416] ss:$9 sm:$0xff] %v410
        %v418 = vld [vmem:[#allocation1] sm:$0xff]
        %419 = vset.pattern.permute.xlu0 0
        %420 = vperm.xlu0 %419, %v418
        %v421 = vpop.permute.xlu0 %420
        %v422 = vlaneseq
        %v423 = vand.u32 %v422, 127
        %v424 = vperm.slane %v421, %v423
        %v426 = vmax.f32 %v393, %v424
        %vm427 = vcmask 24576
        %428 = vst.msk [vmem:[#allocation2] sm:$0x1] %vm427, %v426
        // Predicated region
        $region73: #{tpu_custom_call.1} parent=51 // pred_check
          %p429 = pneg %p386
        $region74: #{tpu_custom_call.1} parent=51 // pred_check_branch
          %431 = sbr.rel (%p429) target = $region76
        $region75: #{tpu_custom_call.1} parent=51 // pred_region
          %v432 = vld [vmem:[#allocation2] sm:$0x1]
          %v433 = vld [vmem:[#allocation6] sm:$0x1]
          %v434 = vmul.f32 %v432, %v433
          %v435 = vld [vmem:[%s2] sm:$0x1]
          %v436 = vadd.f32 %v434, %v435
          %v437 = vmax.f32 %v436, 0.0
          %v438 = vld [vmem:[#allocation8] sm:$0xf]
          %vm439 = vcmask 31744
          %v441 = vsel %vm439, %v437, 0
          %v444 = vsel %vm400, %v438, 0
          %446 = vmatpush.msra.mxu0 0.0
          %447 = vmatpush.msra.mxu0 0.0
          %448 = vmatpush.msra.mxu0 0.0
          %449 = vmatpush.msra.mxu0 0.0
          %450 = vmatpush.msra.mxu0 0.0
          %451 = vmatpush.msra.mxu0 0.0
          %452 = vmatpush.msra.mxu0 0.0
          %453 = vmatpush.msra.mxu0 0.0
          %454 = vmatpush.msra.mxu0 0.0
          %455 = vmatpush.msra.mxu0 0.0
          %456 = vmatpush.msra.mxu0 0.0
          %457 = vmatpush.msra.mxu0 0.0
          %458 = vmatpush.msra.mxu0 0.0
          %459 = vmatpush.msra.mxu0 0.0
          %460 = vmatpush.msra.mxu0 0.0
          %461 = vmatpush.msra.mxu0 %v444
          %462 = vmatmul.f32.gmra.mxu0 %v441
          %v463 = vpop.f32.mrf.mxu0
          %v464 = vadd.f32 0.0, %v463
          %465 = vdwg.mxu0
          %v466 = vld [vmem:[%s4] sm:$0x1]
          %v467 = vmul.f32 %v464, %v466
          %v468 = vld [vmem:[%s5] sm:$0x1]
          %v469 = vadd.f32 %v467, %v468
          %v470 = vmax.f32 %v469, 0.0
          %v471 = vld [vmem:[#allocation9] sm:$0xff]
          %v472 = vld [vmem:[#allocation9 + $0x8] sm:$0xff]
          %v473 = vld [vmem:[#allocation9 + $0x10] sm:$0xff]
          %v474 = vld [vmem:[#allocation9 + $0x18] sm:$0xff]
          %v475 = vld [vmem:[%s7] sm:$0x1]
          %vm476 = vcmask 261120
          %v478 = vsel %vm476, %v470, 0
          %480 = vmatpush.msra.mxu0 0.0
          %481 = vmatpush.msra.mxu0 0.0
          %482 = vmatpush.msra.mxu0 0.0
          %483 = vmatpush.msra.mxu0 0.0
          %484 = vmatpush.msra.mxu0 0.0
          %485 = vmatpush.msra.mxu0 0.0
          %486 = vmatpush.msra.mxu0 0.0
          %487 = vmatpush.msra.mxu0 0.0
          %488 = vmatpush.msra.mxu0 0.0
          %489 = vmatpush.msra.mxu0 0.0
          %490 = vmatpush.msra.mxu0 0.0
          %491 = vmatpush.msra.mxu0 0.0
          %492 = vmatpush.msra.mxu0 %v474
          %493 = vmatpush.msra.mxu0 %v473
          %494 = vmatpush.msra.mxu0 %v472
          %495 = vmatpush.msra.mxu0 %v471
          %496 = vmatmul.f32.gmra.mxu0 %v478
          %v497 = vpop.f32.mrf.mxu0
          %v498 = vadd.f32 %v475, %v497
          %499 = vdwg.mxu0
          %500 = vst [vmem:[%s384] sm:$0x1] %v498
        $region76: #{tpu_custom_call.1} parent=51 // pred_fallthru
          _
        %s501 = sand.u32 %s222, 1
        %s502 = scalar_lea.sflag [#allocation5], %s501
        %s503 = sand.u32 %s222, 1
        %s504 = scalar_lea.vmem [#allocation11], %s503
        // Predicated region
        $region77: #{tpu_custom_call.1} parent=51 // pred_check
          %p505 = pneg %p232
        $region78: #{tpu_custom_call.1} parent=51 // pred_check_branch
          %507 = sbr.rel (%p505) target = $region80
        $region79: #{tpu_custom_call.1} parent=51 // pred_region
          %509 = vsyncadd %s502, 0
          %s510 = scalar_lea.hbm %s8, %s31
          %s512 = sshll.u32 %s504, 4
          %s513 = int_to_ptr.vmem [resolvable:$true] %s512
          %s514 = sshll.u32 %s510, 4
          %s515 = int_to_ptr.hbm [resolvable:$true] %s514
          %517 = dma.vmem_to_hbm [thread:$0]  %s513, 16, %s515, %s502
        $region80: #{tpu_custom_call.1} parent=51 // pred_fallthru
          _
      $region52: #{tpu_custom_call.1} parent=5 // pred_fallthru
        _
      %p518 = scmp.le.s32.totalorder 2, %s22
      // Predicated region
      $region81: #{tpu_custom_call.1} parent=5 // pred_check
        %p519 = pneg %p518
      $region82: #{tpu_custom_call.1} parent=5 // pred_check_branch
        %521 = sbr.rel (%p519) target = $region84
      $region83: #{tpu_custom_call.1} parent=5 // pred_region
        %s522 = ssub.s32 %s22, 2
        // Predicated region
        $region85: #{tpu_custom_call.1} parent=83 // pred_check
          %p523 = pneg %p238
        $region86: #{tpu_custom_call.1} parent=83 // pred_check_branch
          %525 = sbr.rel (%p523) target = $region88
        $region87: #{tpu_custom_call.1} parent=83 // pred_region
          %s526 = sand.u32 %s223, 1
          %s527 = scalar_lea.sflag [#allocation5], %s526
          %s528 = sand.u32 %s223, 1
          %s529 = scalar_lea.vmem [#allocation11], %s528
          %531 = dma.done %s527, 16
        $region88: #{tpu_custom_call.1} parent=83 // pred_fallthru
          _
      $region84: #{tpu_custom_call.1} parent=5 // pred_fallthru
        _
    $region6: #{tpu_custom_call.1} parent=1 // loop_footer
      %s26 = sadd.s32 1, %s22
    $region7: #{tpu_custom_call.1} parent=1 // loop_footer_branch
      %21 = sbr.rel target = $region3
    $region8: #{tpu_custom_call.1} parent=1 // loop_exit
      _
    %532 = vsyncpa [#allocation4], 1
    %s533 = scalar_lea.sflag [#allocation4], 1
    %534 = vsyncpa %s533, 1
    %535 = vsyncpa [#allocation7], 1
    %536 = vsyncpa [#allocation10], 1
    %537 = vsyncpa [#allocation5], 1
    %s538 = scalar_lea.sflag [#allocation5], 1
    %539 = vsyncpa %s538, 1

</llo_original>
